<compile_context>
chip_gen: v7x
topology: tpu7x:2x2x1
jax: 0.10.0
libtpu: 0.0.40
codegen_flags: <defaults>
</compile_context>

<pallas_src>
import jax
import jax.numpy as jnp
import numpy as np
from jax.experimental import pallas as pl
from jax.experimental.pallas import tpu as pltpu


def lstm_kernel(ids_ref, xtab_ref, Wh_ref, Wp_ref, out_ref):
    TB = ids_ref.shape[0]          # T * B
    V = xtab_ref.shape[0]          # vocab (10)
    H = Wh_ref.shape[0]            # hidden
    B = out_ref.shape[0]           # batch
    T = TB // B

    # ---- Prologue (no recurrence dependency): one one-hot MXU matmul -------
    # xtab already holds emb_table @ [Wgx|Wix|Wfx|Wox] + [bg|bi|bf|bo], so this
    # single matmul produces the full per-timestep x-path, bias included.
    ids = ids_ref[...]                                           # (T*B, 1) int32
    iota = jax.lax.broadcasted_iota(jnp.int32, (TB, V), 1)
    onehot = (iota == ids).astype(jnp.float32)                   # (T*B, V)
    xw = jnp.dot(onehot, xtab_ref[...],
                 preferred_element_type=jnp.float32)             # (T*B, 4H), 2 vregs

    Wh = Wh_ref[...]                                             # (H, 4H), loop-invariant

    # ---- Serial recurrence: fully static unroll, one fused matmul per step --
    h = jnp.zeros((B, H), jnp.float32)
    c = jnp.zeros((B, H), jnp.float32)
    for t in range(T):                                           # T is small & static
        xw_t = xw[t * B:(t + 1) * B, :]                          # static vreg slice
        gates = xw_t + jnp.dot(h, Wh, preferred_element_type=jnp.float32)
        # 2 full-width EUP launches instead of 4 narrow ones:
        sig = jax.nn.sigmoid(gates)                              # (B, 4H)
        th = jnp.tanh(gates)                                     # (B, 4H)
        g = th[:, 0:H]
        i = sig[:, H:2 * H]
        f = sig[:, 2 * H:3 * H]
        o = sig[:, 3 * H:4 * H]
        c = g * i + c * f
        h = jnp.tanh(c) * o

    # ---- Final projection into a lane-dense (B, 128k) output tile ----------
    out_ref[...] = jnp.dot(h, Wp_ref[...], preferred_element_type=jnp.float32)


def lstm_forward(x_tokens, params):
    """x_tokens: (T, B) int32 token ids in [0, 10). Returns (B, num_classes) f32."""
    (emb_table, Wgx, Wgh, Wix, Wih, Wfx, Wfh, Wox, Woh, Wph,
     bg, bi, bf, bo, bp) = params

    T, B = x_tokens.shape
    H = Wgx.shape[1]
    C = Wph.shape[1]
    CP = ((C + 127) // 128) * 128          # lane-dense padded class dim

    # Pack gates along lanes: [g | i | f | o] -> 4H = 128 for H=32, then fold the
    # whole parameter-only x-path (emb @ Wx + b) into ONE (10, 4H) table.
    Wx = jnp.concatenate([Wgx, Wix, Wfx, Wox], axis=1)           # (E, 4H)
    Wh = jnp.concatenate([Wgh, Wih, Wfh, Woh], axis=1)           # (H, 4H)
    b4 = jnp.concatenate([bg, bi, bf, bo]).reshape(1, 4 * H)     # (1, 4H)
    xtab = emb_table @ Wx + b4                                   # (10, 4H)

    # Lane-dense classifier: zero-pad to CP lanes; wrapper slices back to C.
    Wp = jnp.zeros((H, CP), jnp.float32).at[:, :C].set(Wph)

    ids = x_tokens.reshape(T * B, 1).astype(jnp.int32)

    vmem = pl.BlockSpec(memory_space=pltpu.MemorySpace.VMEM)
    out = pl.pallas_call(
        lstm_kernel,
        out_shape=jax.ShapeDtypeStruct((B, CP), jnp.float32),
        in_specs=[vmem] * 4,
        out_specs=vmem,
    )(ids, xtab, Wh, Wp)

    # bp added here (exact) to drop one tiny DMA'd kernel input.
    return out[:, :C] + bp


def lstm_reference(x_tokens, params):
    """Pure-JAX reference mirroring the PyTorch forward."""
    (emb_table, Wgx, Wgh, Wix, Wih, Wfx, Wfh, Wox, Woh, Wph,
     bg, bi, bf, bo, bp) = params
    T, B = x_tokens.shape
    H = Wgx.shape[1]
    state = jnp.zeros((B, H), jnp.float32)
    hidden = jnp.zeros((B, H), jnp.float32)
    for t in range(T):
        embed = emb_table[x_tokens[t]]
        g = jnp.tanh(embed @ Wgx + hidden @ Wgh + bg)
        i = jax.nn.sigmoid(embed @ Wix + hidden @ Wih + bi)
        f = jax.nn.sigmoid(embed @ Wfx + hidden @ Wfh + bf)
        o = jax.nn.sigmoid(embed @ Wox + hidden @ Woh + bo)
        state = g * i + state * f
        hidden = jnp.tanh(state) * o
    return hidden @ Wph + bp


def init_params(key, embed_dim, num_hidden, num_classes):
    ks = jax.random.split(key, 10)
    orth = jax.nn.initializers.orthogonal()
    emb_table = jax.random.normal(ks[0], (10, embed_dim), jnp.float32)  # nn.Embedding ~ N(0,1)
    Wgx = orth(ks[1], (embed_dim, num_hidden), jnp.float32)
    Wgh = orth(ks[2], (num_hidden, num_hidden), jnp.float32)
    Wix = orth(ks[3], (embed_dim, num_hidden), jnp.float32)
    Wih = orth(ks[4], (num_hidden, num_hidden), jnp.float32)
    Wfx = orth(ks[5], (embed_dim, num_hidden), jnp.float32)
    Wfh = orth(ks[6], (num_hidden, num_hidden), jnp.float32)
    Wox = orth(ks[7], (embed_dim, num_hidden), jnp.float32)
    Woh = orth(ks[8], (num_hidden, num_hidden), jnp.float32)
    Wph = orth(ks[9], (num_hidden, num_classes), jnp.float32)
    bg = jnp.zeros((num_hidden,), jnp.float32)
    bi = jnp.zeros((num_hidden,), jnp.float32)
    bf = jnp.zeros((num_hidden,), jnp.float32)
    bo = jnp.zeros((num_hidden,), jnp.float32)
    bp = jnp.zeros((num_classes,), jnp.float32)
    return (emb_table, Wgx, Wgh, Wix, Wih, Wfx, Wfh, Wox, Woh, Wph,
            bg, bi, bf, bo, bp)


if __name__ == "__main__":
    T, B = 8, 2
    embed_dim, num_hidden, num_classes = 16, 32, 10

    key = jax.random.PRNGKey(0)
    k_param, k_data = jax.random.split(key)
    params = init_params(k_param, embed_dim, num_hidden, num_classes)

    # Token input (T, B), digits 0..9 -- same convention as the PyTorch forward.
    x_tokens = jax.random.randint(k_data, (T, B), 0, 10, dtype=jnp.int32)

    out = lstm_forward(x_tokens, params)
    out = jax.block_until_ready(out)

    ref = lstm_reference(x_tokens, params)
    np.testing.assert_allclose(np.asarray(out), np.asarray(ref), rtol=1e-5, atol=1e-5)

    print("KERNEL_OK")
</pallas_src>

<mosaic_0001>
module attributes {stable_mosaic.version = 11 : i64} {
  func.func @lstm_kernel(%arg0: memref<16x1xi32, #tpu.memory_space<vmem>>, %arg1: memref<10x128xf32, #tpu.memory_space<vmem>>, %arg2: memref<32x128xf32, #tpu.memory_space<vmem>>, %arg3: memref<32x128xf32, #tpu.memory_space<vmem>>, %arg4: memref<2x128xf32, #tpu.memory_space<vmem>>) attributes {dimension_semantics = [], scalar_prefetch = 0 : i64, scratch_operands = 0 : i64, tpu.core_type = #tpu.core_type<tc>} {
    %c0 = arith.constant 0 : index
    %c0_0 = arith.constant 0 : index
    %0 = vector.load %arg0[%c0, %c0_0] : memref<16x1xi32, #tpu.memory_space<vmem>>, vector<16x1xi32>
    %1 = tpu.iota {dimensions = array<i32: 1>} : vector<16x10xi32>
    %2 = vector.broadcast %0 : vector<16x1xi32> to vector<16x10xi32>
    %3 = arith.cmpi eq, %1, %2 : vector<16x10xi32>
    %4 = arith.extui %3 : vector<16x10xi1> to vector<16x10xi32>
    %5 = arith.sitofp %4 : vector<16x10xi32> to vector<16x10xf32>
    %c0_1 = arith.constant 0 : index
    %c0_2 = arith.constant 0 : index
    %6 = vector.load %arg1[%c0_1, %c0_2] : memref<10x128xf32, #tpu.memory_space<vmem>>, vector<10x128xf32>
    %cst = arith.constant dense<0.000000e+00> : vector<16x128xf32>
    %7 = tpu.matmul %5, %6, %cst {dimension_numbers = #tpu.dot_dimension_numbers<[1], [0], [0], [1], [0, 0, 1, 1], [], []>} : vector<16x10xf32>, vector<10x128xf32>, vector<16x128xf32> -> vector<16x128xf32>
    %c0_3 = arith.constant 0 : index
    %c0_4 = arith.constant 0 : index
    %8 = vector.load %arg2[%c0_3, %c0_4] : memref<32x128xf32, #tpu.memory_space<vmem>>, vector<32x128xf32>
    %cst_5 = arith.constant 0.000000e+00 : f32
    %9 = vector.broadcast %cst_5 : f32 to vector<2x32xf32>
    %cst_6 = arith.constant 0.000000e+00 : f32
    %10 = vector.broadcast %cst_6 : f32 to vector<2x32xf32>
    %11 = vector.extract_strided_slice %7 {offsets = [0, 0], sizes = [2, 128], strides = [1, 1]} : vector<16x128xf32> to vector<2x128xf32>
    %cst_7 = arith.constant dense<0.000000e+00> : vector<2x128xf32>
    %12 = tpu.matmul %9, %8, %cst_7 {dimension_numbers = #tpu.dot_dimension_numbers<[1], [0], [0], [1], [0, 0, 1, 1], [], []>} : vector<2x32xf32>, vector<32x128xf32>, vector<2x128xf32> -> vector<2x128xf32>
    %13 = arith.addf %11, %12 : vector<2x128xf32>
    %14 = arith.negf %13 : vector<2x128xf32>
    %15 = math.exp %14 : vector<2x128xf32>
    %cst_8 = arith.constant 1.000000e+00 : f32
    %16 = vector.broadcast %cst_8 : f32 to vector<2x128xf32>
    %17 = arith.addf %16, %15 : vector<2x128xf32>
    %18 = arith.divf %16, %17 : vector<2x128xf32>
    %19 = math.tanh %13 : vector<2x128xf32>
    %20 = vector.extract_strided_slice %19 {offsets = [0, 0], sizes = [2, 32], strides = [1, 1]} : vector<2x128xf32> to vector<2x32xf32>
    %21 = vector.extract_strided_slice %18 {offsets = [0, 32], sizes = [2, 32], strides = [1, 1]} : vector<2x128xf32> to vector<2x32xf32>
    %22 = vector.extract_strided_slice %18 {offsets = [0, 64], sizes = [2, 32], strides = [1, 1]} : vector<2x128xf32> to vector<2x32xf32>
    %23 = vector.extract_strided_slice %18 {offsets = [0, 96], sizes = [2, 32], strides = [1, 1]} : vector<2x128xf32> to vector<2x32xf32>
    %24 = arith.mulf %20, %21 : vector<2x32xf32>
    %25 = arith.mulf %10, %22 : vector<2x32xf32>
    %26 = arith.addf %24, %25 : vector<2x32xf32>
    %27 = math.tanh %26 : vector<2x32xf32>
    %28 = arith.mulf %27, %23 : vector<2x32xf32>
    %29 = vector.extract_strided_slice %7 {offsets = [2, 0], sizes = [2, 128], strides = [1, 1]} : vector<16x128xf32> to vector<2x128xf32>
    %cst_9 = arith.constant dense<0.000000e+00> : vector<2x128xf32>
    %30 = tpu.matmul %28, %8, %cst_9 {dimension_numbers = #tpu.dot_dimension_numbers<[1], [0], [0], [1], [0, 0, 1, 1], [], []>} : vector<2x32xf32>, vector<32x128xf32>, vector<2x128xf32> -> vector<2x128xf32>
    %31 = arith.addf %29, %30 : vector<2x128xf32>
    %32 = arith.negf %31 : vector<2x128xf32>
    %33 = math.exp %32 : vector<2x128xf32>
    %cst_10 = arith.constant 1.000000e+00 : f32
    %34 = vector.broadcast %cst_10 : f32 to vector<2x128xf32>
    %35 = arith.addf %34, %33 : vector<2x128xf32>
    %36 = arith.divf %34, %35 : vector<2x128xf32>
    %37 = math.tanh %31 : vector<2x128xf32>
    %38 = vector.extract_strided_slice %37 {offsets = [0, 0], sizes = [2, 32], strides = [1, 1]} : vector<2x128xf32> to vector<2x32xf32>
    %39 = vector.extract_strided_slice %36 {offsets = [0, 32], sizes = [2, 32], strides = [1, 1]} : vector<2x128xf32> to vector<2x32xf32>
    %40 = vector.extract_strided_slice %36 {offsets = [0, 64], sizes = [2, 32], strides = [1, 1]} : vector<2x128xf32> to vector<2x32xf32>
    %41 = vector.extract_strided_slice %36 {offsets = [0, 96], sizes = [2, 32], strides = [1, 1]} : vector<2x128xf32> to vector<2x32xf32>
    %42 = arith.mulf %38, %39 : vector<2x32xf32>
    %43 = arith.mulf %26, %40 : vector<2x32xf32>
    %44 = arith.addf %42, %43 : vector<2x32xf32>
    %45 = math.tanh %44 : vector<2x32xf32>
    %46 = arith.mulf %45, %41 : vector<2x32xf32>
    %47 = vector.extract_strided_slice %7 {offsets = [4, 0], sizes = [2, 128], strides = [1, 1]} : vector<16x128xf32> to vector<2x128xf32>
    %cst_11 = arith.constant dense<0.000000e+00> : vector<2x128xf32>
    %48 = tpu.matmul %46, %8, %cst_11 {dimension_numbers = #tpu.dot_dimension_numbers<[1], [0], [0], [1], [0, 0, 1, 1], [], []>} : vector<2x32xf32>, vector<32x128xf32>, vector<2x128xf32> -> vector<2x128xf32>
    %49 = arith.addf %47, %48 : vector<2x128xf32>
    %50 = arith.negf %49 : vector<2x128xf32>
    %51 = math.exp %50 : vector<2x128xf32>
    %cst_12 = arith.constant 1.000000e+00 : f32
    %52 = vector.broadcast %cst_12 : f32 to vector<2x128xf32>
    %53 = arith.addf %52, %51 : vector<2x128xf32>
    %54 = arith.divf %52, %53 : vector<2x128xf32>
    %55 = math.tanh %49 : vector<2x128xf32>
    %56 = vector.extract_strided_slice %55 {offsets = [0, 0], sizes = [2, 32], strides = [1, 1]} : vector<2x128xf32> to vector<2x32xf32>
    %57 = vector.extract_strided_slice %54 {offsets = [0, 32], sizes = [2, 32], strides = [1, 1]} : vector<2x128xf32> to vector<2x32xf32>
    %58 = vector.extract_strided_slice %54 {offsets = [0, 64], sizes = [2, 32], strides = [1, 1]} : vector<2x128xf32> to vector<2x32xf32>
    %59 = vector.extract_strided_slice %54 {offsets = [0, 96], sizes = [2, 32], strides = [1, 1]} : vector<2x128xf32> to vector<2x32xf32>
    %60 = arith.mulf %56, %57 : vector<2x32xf32>
    %61 = arith.mulf %44, %58 : vector<2x32xf32>
    %62 = arith.addf %60, %61 : vector<2x32xf32>
    %63 = math.tanh %62 : vector<2x32xf32>
    %64 = arith.mulf %63, %59 : vector<2x32xf32>
    %65 = vector.extract_strided_slice %7 {offsets = [6, 0], sizes = [2, 128], strides = [1, 1]} : vector<16x128xf32> to vector<2x128xf32>
    %cst_13 = arith.constant dense<0.000000e+00> : vector<2x128xf32>
    %66 = tpu.matmul %64, %8, %cst_13 {dimension_numbers = #tpu.dot_dimension_numbers<[1], [0], [0], [1], [0, 0, 1, 1], [], []>} : vector<2x32xf32>, vector<32x128xf32>, vector<2x128xf32> -> vector<2x128xf32>
    %67 = arith.addf %65, %66 : vector<2x128xf32>
    %68 = arith.negf %67 : vector<2x128xf32>
    %69 = math.exp %68 : vector<2x128xf32>
    %cst_14 = arith.constant 1.000000e+00 : f32
    %70 = vector.broadcast %cst_14 : f32 to vector<2x128xf32>
    %71 = arith.addf %70, %69 : vector<2x128xf32>
    %72 = arith.divf %70, %71 : vector<2x128xf32>
    %73 = math.tanh %67 : vector<2x128xf32>
    %74 = vector.extract_strided_slice %73 {offsets = [0, 0], sizes = [2, 32], strides = [1, 1]} : vector<2x128xf32> to vector<2x32xf32>
    %75 = vector.extract_strided_slice %72 {offsets = [0, 32], sizes = [2, 32], strides = [1, 1]} : vector<2x128xf32> to vector<2x32xf32>
    %76 = vector.extract_strided_slice %72 {offsets = [0, 64], sizes = [2, 32], strides = [1, 1]} : vector<2x128xf32> to vector<2x32xf32>
    %77 = vector.extract_strided_slice %72 {offsets = [0, 96], sizes = [2, 32], strides = [1, 1]} : vector<2x128xf32> to vector<2x32xf32>
    %78 = arith.mulf %74, %75 : vector<2x32xf32>
    %79 = arith.mulf %62, %76 : vector<2x32xf32>
    %80 = arith.addf %78, %79 : vector<2x32xf32>
    %81 = math.tanh %80 : vector<2x32xf32>
    %82 = arith.mulf %81, %77 : vector<2x32xf32>
    %83 = vector.extract_strided_slice %7 {offsets = [8, 0], sizes = [2, 128], strides = [1, 1]} : vector<16x128xf32> to vector<2x128xf32>
    %cst_15 = arith.constant dense<0.000000e+00> : vector<2x128xf32>
    %84 = tpu.matmul %82, %8, %cst_15 {dimension_numbers = #tpu.dot_dimension_numbers<[1], [0], [0], [1], [0, 0, 1, 1], [], []>} : vector<2x32xf32>, vector<32x128xf32>, vector<2x128xf32> -> vector<2x128xf32>
    %85 = arith.addf %83, %84 : vector<2x128xf32>
    %86 = arith.negf %85 : vector<2x128xf32>
    %87 = math.exp %86 : vector<2x128xf32>
    %cst_16 = arith.constant 1.000000e+00 : f32
    %88 = vector.broadcast %cst_16 : f32 to vector<2x128xf32>
    %89 = arith.addf %88, %87 : vector<2x128xf32>
    %90 = arith.divf %88, %89 : vector<2x128xf32>
    %91 = math.tanh %85 : vector<2x128xf32>
    %92 = vector.extract_strided_slice %91 {offsets = [0, 0], sizes = [2, 32], strides = [1, 1]} : vector<2x128xf32> to vector<2x32xf32>
    %93 = vector.extract_strided_slice %90 {offsets = [0, 32], sizes = [2, 32], strides = [1, 1]} : vector<2x128xf32> to vector<2x32xf32>
    %94 = vector.extract_strided_slice %90 {offsets = [0, 64], sizes = [2, 32], strides = [1, 1]} : vector<2x128xf32> to vector<2x32xf32>
    %95 = vector.extract_strided_slice %90 {offsets = [0, 96], sizes = [2, 32], strides = [1, 1]} : vector<2x128xf32> to vector<2x32xf32>
    %96 = arith.mulf %92, %93 : vector<2x32xf32>
    %97 = arith.mulf %80, %94 : vector<2x32xf32>
    %98 = arith.addf %96, %97 : vector<2x32xf32>
    %99 = math.tanh %98 : vector<2x32xf32>
    %100 = arith.mulf %99, %95 : vector<2x32xf32>
    %101 = vector.extract_strided_slice %7 {offsets = [10, 0], sizes = [2, 128], strides = [1, 1]} : vector<16x128xf32> to vector<2x128xf32>
    %cst_17 = arith.constant dense<0.000000e+00> : vector<2x128xf32>
    %102 = tpu.matmul %100, %8, %cst_17 {dimension_numbers = #tpu.dot_dimension_numbers<[1], [0], [0], [1], [0, 0, 1, 1], [], []>} : vector<2x32xf32>, vector<32x128xf32>, vector<2x128xf32> -> vector<2x128xf32>
    %103 = arith.addf %101, %102 : vector<2x128xf32>
    %104 = arith.negf %103 : vector<2x128xf32>
    %105 = math.exp %104 : vector<2x128xf32>
    %cst_18 = arith.constant 1.000000e+00 : f32
    %106 = vector.broadcast %cst_18 : f32 to vector<2x128xf32>
    %107 = arith.addf %106, %105 : vector<2x128xf32>
    %108 = arith.divf %106, %107 : vector<2x128xf32>
    %109 = math.tanh %103 : vector<2x128xf32>
    %110 = vector.extract_strided_slice %109 {offsets = [0, 0], sizes = [2, 32], strides = [1, 1]} : vector<2x128xf32> to vector<2x32xf32>
    %111 = vector.extract_strided_slice %108 {offsets = [0, 32], sizes = [2, 32], strides = [1, 1]} : vector<2x128xf32> to vector<2x32xf32>
    %112 = vector.extract_strided_slice %108 {offsets = [0, 64], sizes = [2, 32], strides = [1, 1]} : vector<2x128xf32> to vector<2x32xf32>
    %113 = vector.extract_strided_slice %108 {offsets = [0, 96], sizes = [2, 32], strides = [1, 1]} : vector<2x128xf32> to vector<2x32xf32>
    %114 = arith.mulf %110, %111 : vector<2x32xf32>
    %115 = arith.mulf %98, %112 : vector<2x32xf32>
    %116 = arith.addf %114, %115 : vector<2x32xf32>
    %117 = math.tanh %116 : vector<2x32xf32>
    %118 = arith.mulf %117, %113 : vector<2x32xf32>
    %119 = vector.extract_strided_slice %7 {offsets = [12, 0], sizes = [2, 128], strides = [1, 1]} : vector<16x128xf32> to vector<2x128xf32>
    %cst_19 = arith.constant dense<0.000000e+00> : vector<2x128xf32>
    %120 = tpu.matmul %118, %8, %cst_19 {dimension_numbers = #tpu.dot_dimension_numbers<[1], [0], [0], [1], [0, 0, 1, 1], [], []>} : vector<2x32xf32>, vector<32x128xf32>, vector<2x128xf32> -> vector<2x128xf32>
    %121 = arith.addf %119, %120 : vector<2x128xf32>
    %122 = arith.negf %121 : vector<2x128xf32>
    %123 = math.exp %122 : vector<2x128xf32>
    %cst_20 = arith.constant 1.000000e+00 : f32
    %124 = vector.broadcast %cst_20 : f32 to vector<2x128xf32>
    %125 = arith.addf %124, %123 : vector<2x128xf32>
    %126 = arith.divf %124, %125 : vector<2x128xf32>
    %127 = math.tanh %121 : vector<2x128xf32>
    %128 = vector.extract_strided_slice %127 {offsets = [0, 0], sizes = [2, 32], strides = [1, 1]} : vector<2x128xf32> to vector<2x32xf32>
    %129 = vector.extract_strided_slice %126 {offsets = [0, 32], sizes = [2, 32], strides = [1, 1]} : vector<2x128xf32> to vector<2x32xf32>
    %130 = vector.extract_strided_slice %126 {offsets = [0, 64], sizes = [2, 32], strides = [1, 1]} : vector<2x128xf32> to vector<2x32xf32>
    %131 = vector.extract_strided_slice %126 {offsets = [0, 96], sizes = [2, 32], strides = [1, 1]} : vector<2x128xf32> to vector<2x32xf32>
    %132 = arith.mulf %128, %129 : vector<2x32xf32>
    %133 = arith.mulf %116, %130 : vector<2x32xf32>
    %134 = arith.addf %132, %133 : vector<2x32xf32>
    %135 = math.tanh %134 : vector<2x32xf32>
    %136 = arith.mulf %135, %131 : vector<2x32xf32>
    %137 = vector.extract_strided_slice %7 {offsets = [14, 0], sizes = [2, 128], strides = [1, 1]} : vector<16x128xf32> to vector<2x128xf32>
    %cst_21 = arith.constant dense<0.000000e+00> : vector<2x128xf32>
    %138 = tpu.matmul %136, %8, %cst_21 {dimension_numbers = #tpu.dot_dimension_numbers<[1], [0], [0], [1], [0, 0, 1, 1], [], []>} : vector<2x32xf32>, vector<32x128xf32>, vector<2x128xf32> -> vector<2x128xf32>
    %139 = arith.addf %137, %138 : vector<2x128xf32>
    %140 = arith.negf %139 : vector<2x128xf32>
    %141 = math.exp %140 : vector<2x128xf32>
    %cst_22 = arith.constant 1.000000e+00 : f32
    %142 = vector.broadcast %cst_22 : f32 to vector<2x128xf32>
    %143 = arith.addf %142, %141 : vector<2x128xf32>
    %144 = arith.divf %142, %143 : vector<2x128xf32>
    %145 = math.tanh %139 : vector<2x128xf32>
    %146 = vector.extract_strided_slice %145 {offsets = [0, 0], sizes = [2, 32], strides = [1, 1]} : vector<2x128xf32> to vector<2x32xf32>
    %147 = vector.extract_strided_slice %144 {offsets = [0, 32], sizes = [2, 32], strides = [1, 1]} : vector<2x128xf32> to vector<2x32xf32>
    %148 = vector.extract_strided_slice %144 {offsets = [0, 64], sizes = [2, 32], strides = [1, 1]} : vector<2x128xf32> to vector<2x32xf32>
    %149 = vector.extract_strided_slice %144 {offsets = [0, 96], sizes = [2, 32], strides = [1, 1]} : vector<2x128xf32> to vector<2x32xf32>
    %150 = arith.mulf %146, %147 : vector<2x32xf32>
    %151 = arith.mulf %134, %148 : vector<2x32xf32>
    %152 = arith.addf %150, %151 : vector<2x32xf32>
    %153 = math.tanh %152 : vector<2x32xf32>
    %154 = arith.mulf %153, %149 : vector<2x32xf32>
    %c0_23 = arith.constant 0 : index
    %c0_24 = arith.constant 0 : index
    %155 = vector.load %arg3[%c0_23, %c0_24] : memref<32x128xf32, #tpu.memory_space<vmem>>, vector<32x128xf32>
    %cst_25 = arith.constant dense<0.000000e+00> : vector<2x128xf32>
    %156 = tpu.matmul %154, %155, %cst_25 {dimension_numbers = #tpu.dot_dimension_numbers<[1], [0], [0], [1], [0, 0, 1, 1], [], []>} : vector<2x32xf32>, vector<32x128xf32>, vector<2x128xf32> -> vector<2x128xf32>
    %c0_26 = arith.constant 0 : index
    %c0_27 = arith.constant 0 : index
    %157 = vector.load %arg4[%c0_26, %c0_27] : memref<2x128xf32, #tpu.memory_space<vmem>>, vector<2x128xf32>
    tpu.vector_store %arg4[%c0_26, %c0_27], %156 {strides = array<i32>} : memref<2x128xf32, #tpu.memory_space<vmem>>, vector<2x128xf32>,
    return
  }
}

</mosaic_0001>

<llo_original>
// kernel: tpu_custom_call.1
$region0: #{tpu_custom_call.1}
  #allocation0 [shape = 'u32[]', space=smem, size = 0x4, offset = 0x4, fixed_abs, tag = 'smem constant byte address 0x4 - core index']
  #allocation1 [shape = 'u32[144,128]{1,0:T(1,128)}', space=vmem, size = 0x12000, scoped, tag = 'internal scratch']
  %s0 = inlined_call_operand.vmem [shape: s32[16,1], index: 0, kind: input, shape index: {}]
  %s1 = inlined_call_operand.vmem [shape: f32[10,128], index: 1, kind: input, shape index: {}]
  %s2 = inlined_call_operand.hbm [shape: f32[32,128], index: 2, kind: input, shape index: {}]
  %s3 = inlined_call_operand.hbm [shape: f32[32,128], index: 3, kind: input, shape index: {}]
  %s4 = inlined_call_operand.hbm [shape: f32[2,128], index: 4, kind: output, shape index: {}]
  %s5 = sld [smem:[#allocation0]]
  $region34: #{tpu_custom_call.1} parent=0
    _
  %s7 = ssub.s32 1, %s5
  %s8 = scalar_select 0, %s7, %s5
  $region1: #{tpu_custom_call.1} parent=0
    #allocation2 [shape = 'u8[16384]{0}', space=vmem, size = 0x4000, scoped, tag = 'input window, operand 2, single buffered']
    #allocation3 [shape = 's32[1]{0}', space=sflag, size = 0x4, scoped, tag = 'scoped memory for tpu_custom_call.1']
    #allocation4 [shape = 's32[1]{0}', space=sflag, size = 0x4, scoped, tag = 'scoped memory for tpu_custom_call.1']
    #allocation5 [shape = 'u8[16384]{0}', space=vmem, size = 0x4000, scoped, tag = 'input window, operand 3, single buffered']
    #allocation6 [shape = 's32[1]{0}', space=sflag, size = 0x4, scoped, tag = 'scoped memory for tpu_custom_call.1']
    #allocation7 [shape = 'u8[1024]{0}', space=vmem, size = 0x400, scoped, tag = 'output window, operand 0, single buffered']
    %9 = vsyncpa [#allocation3], 0
    %10 = vsyncpa [#allocation6], 0
    %11 = vsyncpa [#allocation4], 0
    // Predicated region
    $region2: #{tpu_custom_call.1} parent=1 // pred_check
      _
    $region3: #{tpu_custom_call.1} parent=1 // pred_check_branch
      %13 = sbr.rel (0) target = $region5
    $region4: #{tpu_custom_call.1} parent=1 // pred_region
      _
    $region5: #{tpu_custom_call.1} parent=1 // pred_fallthru
      _
    // Predicated region
    $region6: #{tpu_custom_call.1} parent=1 // pred_check
      _
    $region7: #{tpu_custom_call.1} parent=1 // pred_check_branch
      %15 = sbr.rel (0) target = $region9
    $region8: #{tpu_custom_call.1} parent=1 // pred_region
      _
    $region9: #{tpu_custom_call.1} parent=1 // pred_fallthru
      _
    // Predicated region
    $region10: #{tpu_custom_call.1} parent=1 // pred_check
      _
    $region11: #{tpu_custom_call.1} parent=1 // pred_check_branch
      %17 = sbr.rel (0) target = $region13
    $region12: #{tpu_custom_call.1} parent=1 // pred_region
      %s19 = ssub.s32 512, 512
      %20 = vsyncadd [#allocation3], %s19
      %s21 = sshll.u32 [#allocation2], 4
      %s22 = int_to_ptr.vmem [resolvable:$true] %s21
      %27 = dma.hbm_to_vmem [thread:$0]  %s2, 512, %s22, [#allocation3], 128, 128, 8
    $region13: #{tpu_custom_call.1} parent=1 // pred_fallthru
      _
    // Predicated region
    $region14: #{tpu_custom_call.1} parent=1 // pred_check
      _
    $region15: #{tpu_custom_call.1} parent=1 // pred_check_branch
      %29 = sbr.rel (0) target = $region17
    $region16: #{tpu_custom_call.1} parent=1 // pred_region
      %s31 = ssub.s32 512, 512
      %32 = vsyncadd [#allocation6], %s31
      %s33 = sshll.u32 [#allocation5], 4
      %s34 = int_to_ptr.vmem [resolvable:$true] %s33
      %39 = dma.hbm_to_vmem [thread:$0]  %s3, 512, %s34, [#allocation6], 128, 128, 8
    $region17: #{tpu_custom_call.1} parent=1 // pred_fallthru
      _
    // Predicated region
    $region18: #{tpu_custom_call.1} parent=1 // pred_check
      _
    $region19: #{tpu_custom_call.1} parent=1 // pred_check_branch
      %41 = sbr.rel (0) target = $region21
    $region20: #{tpu_custom_call.1} parent=1 // pred_region
      %42 = dma.done [#allocation3], 512
    $region21: #{tpu_custom_call.1} parent=1 // pred_fallthru
      _
    // Predicated region
    $region22: #{tpu_custom_call.1} parent=1 // pred_check
      _
    $region23: #{tpu_custom_call.1} parent=1 // pred_check_branch
      %44 = sbr.rel (0) target = $region25
    $region24: #{tpu_custom_call.1} parent=1 // pred_region
      %45 = dma.done [#allocation6], 512
    $region25: #{tpu_custom_call.1} parent=1 // pred_fallthru
      _
    %v46 = vld [vmem:[%s0] sm:$0xff]
    %v47 = vld [vmem:[%s0 + $0x8] sm:$0xff]
    %v48 = vlaneseq
    %v49 = vand.u32 %v48, 127
    %50 = vset.pattern.permute.xlu0 0
    %51 = vperm.xlu0 %50, %v46
    %v52 = vpop.permute.xlu0 %51
    %53 = vset.pattern.permute.xlu0 0
    %54 = vperm.xlu0 %53, %v47
    %v55 = vpop.permute.xlu0 %54
    %vm56 = vcmp.eq.s32.totalorder %v49, %v52
    %vm57 = vcmp.eq.s32.totalorder %v49, %v55
    %v58 = vsel %vm56, 1, 0
    %v59 = vsel %vm57, 1, 0
    %v60 = vcvt.s32.f32 %v58
    %v61 = vcvt.s32.f32 %v59
    %v62 = vld [vmem:[%s1] sm:$0xff]
    %v63 = vld [vmem:[%s1 + $0x8] sm:$0x3]
    %vm64 = vcmask 80896
    %v66 = vsel %vm64, %v60, 0
    %v69 = vsel %vm64, %v61, 0
    %vm71 = vcmask 1041408
    %v73 = vsel %vm71, %v63, 0
    %75 = vmatprep.subr.mxu0 0.0
    %76 = vmatpush1.msra.mxu0 %v62
    %77 = vmatprep.subr.mxu0 0.0
    %78 = vmatpush1.msra.mxu0 %v73
    %79 = vmatprep.subr.mxu0 0.0
    %80 = vmatpush1.msra.mxu0 0.0
    %81 = vmatprep.subr.mxu0 0.0
    %82 = vmatpush1.msra.mxu0 0.0
    %83 = vmatprep.subr.mxu0 0.0
    %84 = vmatpush1.msra.mxu0 0.0
    %85 = vmatprep.subr.mxu0 0.0
    %86 = vmatpush1.msra.mxu0 0.0
    %87 = vmatprep.subr.mxu0 0.0
    %88 = vmatpush1.msra.mxu0 0.0
    %89 = vmatprep.subr.mxu0 0.0
    %90 = vmatpush1.msra.mxu0 0.0
    %91 = vmatprep.subr.mxu0 0.0
    %92 = vmatpush1.msra.mxu0 0.0
    %93 = vmatprep.subr.mxu0 0.0
    %94 = vmatpush1.msra.mxu0 0.0
    %95 = vmatprep.subr.mxu0 0.0
    %96 = vmatpush1.msra.mxu0 0.0
    %97 = vmatprep.subr.mxu0 0.0
    %98 = vmatpush1.msra.mxu0 0.0
    %99 = vmatprep.subr.mxu0 0.0
    %100 = vmatpush1.msra.mxu0 0.0
    %101 = vmatprep.subr.mxu0 0.0
    %102 = vmatpush1.msra.mxu0 0.0
    %103 = vmatprep.subr.mxu0 0.0
    %104 = vmatpush1.msra.mxu0 0.0
    %105 = vmatprep.subr.mxu0 0.0
    %106 = vmatpush1.msra.mxu0 0.0
    %107 = vmatprep.subr.mxu0 0.0
    %108 = vmatpush1.msra.mxu0 0.0
    %109 = vmatprep.subr.mxu0 0.0
    %110 = vmatpush1.msra.mxu0 0.0
    %111 = vmatprep.subr.mxu0 0.0
    %112 = vmatpush1.msra.mxu0 0.0
    %113 = vmatprep.subr.mxu0 0.0
    %114 = vmatpush1.msra.mxu0 0.0
    %115 = vmatprep.subr.mxu0 0.0
    %116 = vmatpush1.msra.mxu0 0.0
    %117 = vmatprep.subr.mxu0 0.0
    %118 = vmatpush1.msra.mxu0 0.0
    %119 = vmatprep.subr.mxu0 0.0
    %120 = vmatpush1.msra.mxu0 0.0
    %121 = vmatprep.subr.mxu0 0.0
    %122 = vmatpush1.msra.mxu0 0.0
    %123 = vmatprep.subr.mxu0 0.0
    %124 = vmatpush1.msra.mxu0 0.0
    %125 = vmatprep.subr.mxu0 0.0
    %126 = vmatpush1.msra.mxu0 0.0
    %127 = vmatprep.subr.mxu0 0.0
    %128 = vmatpush1.msra.mxu0 0.0
    %129 = vmatprep.subr.mxu0 0.0
    %130 = vmatpush1.msra.mxu0 0.0
    %131 = vmatprep.subr.mxu0 0.0
    %132 = vmatpush1.msra.mxu0 0.0
    %133 = vmatprep.subr.mxu0 0.0
    %134 = vmatpush1.msra.mxu0 0.0
    %135 = vmatprep.subr.mxu0 0.0
    %136 = vmatpush1.msra.mxu0 0.0
    %137 = vmatprep.subr.mxu0 0.0
    %138 = vmatpush1.msra.mxu0 0.0
    %139 = vmatprep.mubr.f32.mxu0 0.0
    %140 = vmatmul.mubr.f32.gmra.mrb[0].mxu0 %v66
    %v141 = vpop.f32.mrb[0].mxu0
    %v142 = vadd.f32 0.0, %v141
    %v143 = vpop.f32.mrb[0].mxu0
    %144 = vmatprep.mubr.f32.mxu0 0.0
    %145 = vmatmul.mubr.f32.gmra.mrb[0].mxu0 %v69
    %v146 = vpop.f32.mrb[0].mxu0
    %v147 = vadd.f32 0.0, %v146
    %v148 = vpop.f32.mrb[0].mxu0
    %149 = vdwg.mxu0
    %v150 = vld [vmem:[#allocation2] sm:$0xff]
    %v151 = vld [vmem:[#allocation2 + $0x8] sm:$0xff]
    %v152 = vld [vmem:[#allocation2 + $0x10] sm:$0xff]
    %v153 = vld [vmem:[#allocation2 + $0x18] sm:$0xff]
    %vm154 = vcmask 261120
    %v156 = vsel %vm154, 0.0, 0
    %158 = vmatprep.subr.mxu0 0.0
    %159 = vmatpush1.msra.mxu0 %v150
    %160 = vmatprep.subr.mxu0 0.0
    %161 = vmatpush1.msra.mxu0 %v151
    %162 = vmatprep.subr.mxu0 0.0
    %163 = vmatpush1.msra.mxu0 %v152
    %164 = vmatprep.subr.mxu0 0.0
    %165 = vmatpush1.msra.mxu0 %v153
    %166 = vmatprep.subr.mxu0 0.0
    %167 = vmatpush1.msra.mxu0 0.0
    %168 = vmatprep.subr.mxu0 0.0
    %169 = vmatpush1.msra.mxu0 0.0
    %170 = vmatprep.subr.mxu0 0.0
    %171 = vmatpush1.msra.mxu0 0.0
    %172 = vmatprep.subr.mxu0 0.0
    %173 = vmatpush1.msra.mxu0 0.0
    %174 = vmatprep.subr.mxu0 0.0
    %175 = vmatpush1.msra.mxu0 0.0
    %176 = vmatprep.subr.mxu0 0.0
    %177 = vmatpush1.msra.mxu0 0.0
    %178 = vmatprep.subr.mxu0 0.0
    %179 = vmatpush1.msra.mxu0 0.0
    %180 = vmatprep.subr.mxu0 0.0
    %181 = vmatpush1.msra.mxu0 0.0
    %182 = vmatprep.subr.mxu0 0.0
    %183 = vmatpush1.msra.mxu0 0.0
    %184 = vmatprep.subr.mxu0 0.0
    %185 = vmatpush1.msra.mxu0 0.0
    %186 = vmatprep.subr.mxu0 0.0
    %187 = vmatpush1.msra.mxu0 0.0
    %188 = vmatprep.subr.mxu0 0.0
    %189 = vmatpush1.msra.mxu0 0.0
    %190 = vmatprep.subr.mxu0 0.0
    %191 = vmatpush1.msra.mxu0 0.0
    %192 = vmatprep.subr.mxu0 0.0
    %193 = vmatpush1.msra.mxu0 0.0
    %194 = vmatprep.subr.mxu0 0.0
    %195 = vmatpush1.msra.mxu0 0.0
    %196 = vmatprep.subr.mxu0 0.0
    %197 = vmatpush1.msra.mxu0 0.0
    %198 = vmatprep.subr.mxu0 0.0
    %199 = vmatpush1.msra.mxu0 0.0
    %200 = vmatprep.subr.mxu0 0.0
    %201 = vmatpush1.msra.mxu0 0.0
    %202 = vmatprep.subr.mxu0 0.0
    %203 = vmatpush1.msra.mxu0 0.0
    %204 = vmatprep.subr.mxu0 0.0
    %205 = vmatpush1.msra.mxu0 0.0
    %206 = vmatprep.subr.mxu0 0.0
    %207 = vmatpush1.msra.mxu0 0.0
    %208 = vmatprep.subr.mxu0 0.0
    %209 = vmatpush1.msra.mxu0 0.0
    %210 = vmatprep.subr.mxu0 0.0
    %211 = vmatpush1.msra.mxu0 0.0
    %212 = vmatprep.subr.mxu0 0.0
    %213 = vmatpush1.msra.mxu0 0.0
    %214 = vmatprep.subr.mxu0 0.0
    %215 = vmatpush1.msra.mxu0 0.0
    %216 = vmatprep.subr.mxu0 0.0
    %217 = vmatpush1.msra.mxu0 0.0
    %218 = vmatprep.subr.mxu0 0.0
    %219 = vmatpush1.msra.mxu0 0.0
    %220 = vmatprep.subr.mxu0 0.0
    %221 = vmatpush1.msra.mxu0 0.0
    %222 = vmatprep.mubr.f32.mxu0 0.0
    %223 = vmatmul.mubr.f32.gmra.mrb[0].mxu0 %v156
    %v224 = vpop.f32.mrb[0].mxu0
    %v225 = vadd.f32 0.0, %v224
    %v226 = vpop.f32.mrb[0].mxu0
    %227 = vdwg.mxu0
    %v228 = vadd.f32 %v142, %v225
    %v229 = vxor.u32 %v228, 2147483648
    %v230 = vmul.f32 %v229, 1.442695
    %v231 = vpow.pop %v230
    %v232 = vadd.f32 %v231, 1.0
    %v233 = vrcp.pop %v232
    %v234 = vmul.f32 1.0, %v233
    %v235 = vtanh.pop %v228
    %237 = vrot.lane.b32.xlu0 %v234, 96
    %v238 = vpop.permute.xlu0 %237
    %v240 = vmul.f32 %v235, %v238
    %v241 = vmul.f32 %v234, 0.0
    %243 = vrot.lane.b32.xlu0 %v241, 64
    %v244 = vpop.permute.xlu0 %243
    %v246 = vadd.f32 %v240, %v244
    %v247 = vtanh.pop %v246
    %248 = vrot.lane.b32.xlu0 %v234, 32
    %v249 = vpop.permute.xlu0 %248
    %v251 = vmul.f32 %v247, %v249
    %v253 = vsel %vm154, %v251, 0
    %255 = vmatprep.subr.mxu0 0.0
    %256 = vmatpush1.msra.mxu0 %v150
    %257 = vmatprep.subr.mxu0 0.0
    %258 = vmatpush1.msra.mxu0 %v151
    %259 = vmatprep.subr.mxu0 0.0
    %260 = vmatpush1.msra.mxu0 %v152
    %261 = vmatprep.subr.mxu0 0.0
    %262 = vmatpush1.msra.mxu0 %v153
    %263 = vmatprep.subr.mxu0 0.0
    %264 = vmatpush1.msra.mxu0 0.0
    %265 = vmatprep.subr.mxu0 0.0
    %266 = vmatpush1.msra.mxu0 0.0
    %267 = vmatprep.subr.mxu0 0.0
    %268 = vmatpush1.msra.mxu0 0.0
    %269 = vmatprep.subr.mxu0 0.0
    %270 = vmatpush1.msra.mxu0 0.0
    %271 = vmatprep.subr.mxu0 0.0
    %272 = vmatpush1.msra.mxu0 0.0
    %273 = vmatprep.subr.mxu0 0.0
    %274 = vmatpush1.msra.mxu0 0.0
    %275 = vmatprep.subr.mxu0 0.0
    %276 = vmatpush1.msra.mxu0 0.0
    %277 = vmatprep.subr.mxu0 0.0
    %278 = vmatpush1.msra.mxu0 0.0
    %279 = vmatprep.subr.mxu0 0.0
    %280 = vmatpush1.msra.mxu0 0.0
    %281 = vmatprep.subr.mxu0 0.0
    %282 = vmatpush1.msra.mxu0 0.0
    %283 = vmatprep.subr.mxu0 0.0
    %284 = vmatpush1.msra.mxu0 0.0
    %285 = vmatprep.subr.mxu0 0.0
    %286 = vmatpush1.msra.mxu0 0.0
    %287 = vmatprep.subr.mxu0 0.0
    %288 = vmatpush1.msra.mxu0 0.0
    %289 = vmatprep.subr.mxu0 0.0
    %290 = vmatpush1.msra.mxu0 0.0
    %291 = vmatprep.subr.mxu0 0.0
    %292 = vmatpush1.msra.mxu0 0.0
    %293 = vmatprep.subr.mxu0 0.0
    %294 = vmatpush1.msra.mxu0 0.0
    %295 = vmatprep.subr.mxu0 0.0
    %296 = vmatpush1.msra.mxu0 0.0
    %297 = vmatprep.subr.mxu0 0.0
    %298 = vmatpush1.msra.mxu0 0.0
    %299 = vmatprep.subr.mxu0 0.0
    %300 = vmatpush1.msra.mxu0 0.0
    %301 = vmatprep.subr.mxu0 0.0
    %302 = vmatpush1.msra.mxu0 0.0
    %303 = vmatprep.subr.mxu0 0.0
    %304 = vmatpush1.msra.mxu0 0.0
    %305 = vmatprep.subr.mxu0 0.0
    %306 = vmatpush1.msra.mxu0 0.0
    %307 = vmatprep.subr.mxu0 0.0
    %308 = vmatpush1.msra.mxu0 0.0
    %309 = vmatprep.subr.mxu0 0.0
    %310 = vmatpush1.msra.mxu0 0.0
    %311 = vmatprep.subr.mxu0 0.0
    %312 = vmatpush1.msra.mxu0 0.0
    %313 = vmatprep.subr.mxu0 0.0
    %314 = vmatpush1.msra.mxu0 0.0
    %315 = vmatprep.subr.mxu0 0.0
    %316 = vmatpush1.msra.mxu0 0.0
    %317 = vmatprep.subr.mxu0 0.0
    %318 = vmatpush1.msra.mxu0 0.0
    %319 = vmatprep.mubr.f32.mxu0 0.0
    %320 = vmatmul.mubr.f32.gmra.mrb[0].mxu0 %v253
    %v321 = vpop.f32.mrb[0].mxu0
    %v322 = vadd.f32 0.0, %v321
    %v323 = vpop.f32.mrb[0].mxu0
    %324 = vdwg.mxu0
    %v326 = vrot.slane %v322, 6
    %v328 = vadd.f32 %v142, %v326
    %v329 = vxor.u32 %v328, 2147483648
    %v330 = vmul.f32 %v329, 1.442695
    %v331 = vpow.pop %v330
    %v332 = vadd.f32 %v331, 1.0
    %v333 = vrcp.pop %v332
    %v334 = vmul.f32 1.0, %v333
    %v335 = vtanh.pop %v328
    %337 = vrot.lane.b32.xlu0 %v334, 96
    %v338 = vpop.permute.xlu0 %337
    %v340 = vmul.f32 %v335, %v338
    %v341 = vrot.slane %v334, 2
    %342 = vrot.lane.b32.xlu0 %v341, 64
    %v343 = vpop.permute.xlu0 %342
    %v345 = vmul.f32 %v246, %v343
    %v347 = vrot.slane %v345, 6
    %v349 = vadd.f32 %v340, %v347
    %v350 = vtanh.pop %v349
    %351 = vrot.lane.b32.xlu0 %v334, 32
    %v352 = vpop.permute.xlu0 %351
    %v354 = vmul.f32 %v350, %v352
    %v356 = vrot.slane %v354, 2
    %v357 = vsel %vm154, %v356, 0
    %359 = vmatprep.subr.mxu0 0.0
    %360 = vmatpush1.msra.mxu0 %v150
    %361 = vmatprep.subr.mxu0 0.0
    %362 = vmatpush1.msra.mxu0 %v151
    %363 = vmatprep.subr.mxu0 0.0
    %364 = vmatpush1.msra.mxu0 %v152
    %365 = vmatprep.subr.mxu0 0.0
    %366 = vmatpush1.msra.mxu0 %v153
    %367 = vmatprep.subr.mxu0 0.0
    %368 = vmatpush1.msra.mxu0 0.0
    %369 = vmatprep.subr.mxu0 0.0
    %370 = vmatpush1.msra.mxu0 0.0
    %371 = vmatprep.subr.mxu0 0.0
    %372 = vmatpush1.msra.mxu0 0.0
    %373 = vmatprep.subr.mxu0 0.0
    %374 = vmatpush1.msra.mxu0 0.0
    %375 = vmatprep.subr.mxu0 0.0
    %376 = vmatpush1.msra.mxu0 0.0
    %377 = vmatprep.subr.mxu0 0.0
    %378 = vmatpush1.msra.mxu0 0.0
    %379 = vmatprep.subr.mxu0 0.0
    %380 = vmatpush1.msra.mxu0 0.0
    %381 = vmatprep.subr.mxu0 0.0
    %382 = vmatpush1.msra.mxu0 0.0
    %383 = vmatprep.subr.mxu0 0.0
    %384 = vmatpush1.msra.mxu0 0.0
    %385 = vmatprep.subr.mxu0 0.0
    %386 = vmatpush1.msra.mxu0 0.0
    %387 = vmatprep.subr.mxu0 0.0
    %388 = vmatpush1.msra.mxu0 0.0
    %389 = vmatprep.subr.mxu0 0.0
    %390 = vmatpush1.msra.mxu0 0.0
    %391 = vmatprep.subr.mxu0 0.0
    %392 = vmatpush1.msra.mxu0 0.0
    %393 = vmatprep.subr.mxu0 0.0
    %394 = vmatpush1.msra.mxu0 0.0
    %395 = vmatprep.subr.mxu0 0.0
    %396 = vmatpush1.msra.mxu0 0.0
    %397 = vmatprep.subr.mxu0 0.0
    %398 = vmatpush1.msra.mxu0 0.0
    %399 = vmatprep.subr.mxu0 0.0
    %400 = vmatpush1.msra.mxu0 0.0
    %401 = vmatprep.subr.mxu0 0.0
    %402 = vmatpush1.msra.mxu0 0.0
    %403 = vmatprep.subr.mxu0 0.0
    %404 = vmatpush1.msra.mxu0 0.0
    %405 = vmatprep.subr.mxu0 0.0
    %406 = vmatpush1.msra.mxu0 0.0
    %407 = vmatprep.subr.mxu0 0.0
    %408 = vmatpush1.msra.mxu0 0.0
    %409 = vmatprep.subr.mxu0 0.0
    %410 = vmatpush1.msra.mxu0 0.0
    %411 = vmatprep.subr.mxu0 0.0
    %412 = vmatpush1.msra.mxu0 0.0
    %413 = vmatprep.subr.mxu0 0.0
    %414 = vmatpush1.msra.mxu0 0.0
    %415 = vmatprep.subr.mxu0 0.0
    %416 = vmatpush1.msra.mxu0 0.0
    %417 = vmatprep.subr.mxu0 0.0
    %418 = vmatpush1.msra.mxu0 0.0
    %419 = vmatprep.subr.mxu0 0.0
    %420 = vmatpush1.msra.mxu0 0.0
    %421 = vmatprep.subr.mxu0 0.0
    %422 = vmatpush1.msra.mxu0 0.0
    %423 = vmatprep.mubr.f32.mxu0 0.0
    %424 = vmatmul.mubr.f32.gmra.mrb[0].mxu0 %v357
    %v425 = vpop.f32.mrb[0].mxu0
    %v426 = vadd.f32 0.0, %v425
    %v427 = vpop.f32.mrb[0].mxu0
    %428 = vdwg.mxu0
    %v430 = vrot.slane %v426, 4
    %v432 = vadd.f32 %v142, %v430
    %v433 = vxor.u32 %v432, 2147483648
    %v434 = vmul.f32 %v433, 1.442695
    %v435 = vpow.pop %v434
    %v436 = vadd.f32 %v435, 1.0
    %v437 = vrcp.pop %v436
    %v438 = vmul.f32 1.0, %v437
    %v439 = vtanh.pop %v432
    %441 = vrot.lane.b32.xlu0 %v438, 96
    %v442 = vpop.permute.xlu0 %441
    %v444 = vmul.f32 %v439, %v442
    %v445 = vrot.slane %v438, 2
    %446 = vrot.lane.b32.xlu0 %v445, 64
    %v447 = vpop.permute.xlu0 %446
    %v449 = vmul.f32 %v349, %v447
    %v451 = vrot.slane %v449, 6
    %v453 = vadd.f32 %v444, %v451
    %v454 = vtanh.pop %v453
    %455 = vrot.lane.b32.xlu0 %v438, 32
    %v456 = vpop.permute.xlu0 %455
    %v458 = vmul.f32 %v454, %v456
    %v460 = vrot.slane %v458, 4
    %v461 = vsel %vm154, %v460, 0
    %463 = vmatprep.subr.mxu0 0.0
    %464 = vmatpush1.msra.mxu0 %v150
    %465 = vmatprep.subr.mxu0 0.0
    %466 = vmatpush1.msra.mxu0 %v151
    %467 = vmatprep.subr.mxu0 0.0
    %468 = vmatpush1.msra.mxu0 %v152
    %469 = vmatprep.subr.mxu0 0.0
    %470 = vmatpush1.msra.mxu0 %v153
    %471 = vmatprep.subr.mxu0 0.0
    %472 = vmatpush1.msra.mxu0 0.0
    %473 = vmatprep.subr.mxu0 0.0
    %474 = vmatpush1.msra.mxu0 0.0
    %475 = vmatprep.subr.mxu0 0.0
    %476 = vmatpush1.msra.mxu0 0.0
    %477 = vmatprep.subr.mxu0 0.0
    %478 = vmatpush1.msra.mxu0 0.0
    %479 = vmatprep.subr.mxu0 0.0
    %480 = vmatpush1.msra.mxu0 0.0
    %481 = vmatprep.subr.mxu0 0.0
    %482 = vmatpush1.msra.mxu0 0.0
    %483 = vmatprep.subr.mxu0 0.0
    %484 = vmatpush1.msra.mxu0 0.0
    %485 = vmatprep.subr.mxu0 0.0
    %486 = vmatpush1.msra.mxu0 0.0
    %487 = vmatprep.subr.mxu0 0.0
    %488 = vmatpush1.msra.mxu0 0.0
    %489 = vmatprep.subr.mxu0 0.0
    %490 = vmatpush1.msra.mxu0 0.0
    %491 = vmatprep.subr.mxu0 0.0
    %492 = vmatpush1.msra.mxu0 0.0
    %493 = vmatprep.subr.mxu0 0.0
    %494 = vmatpush1.msra.mxu0 0.0
    %495 = vmatprep.subr.mxu0 0.0
    %496 = vmatpush1.msra.mxu0 0.0
    %497 = vmatprep.subr.mxu0 0.0
    %498 = vmatpush1.msra.mxu0 0.0
    %499 = vmatprep.subr.mxu0 0.0
    %500 = vmatpush1.msra.mxu0 0.0
    %501 = vmatprep.subr.mxu0 0.0
    %502 = vmatpush1.msra.mxu0 0.0
    %503 = vmatprep.subr.mxu0 0.0
    %504 = vmatpush1.msra.mxu0 0.0
    %505 = vmatprep.subr.mxu0 0.0
    %506 = vmatpush1.msra.mxu0 0.0
    %507 = vmatprep.subr.mxu0 0.0
    %508 = vmatpush1.msra.mxu0 0.0
    %509 = vmatprep.subr.mxu0 0.0
    %510 = vmatpush1.msra.mxu0 0.0
    %511 = vmatprep.subr.mxu0 0.0
    %512 = vmatpush1.msra.mxu0 0.0
    %513 = vmatprep.subr.mxu0 0.0
    %514 = vmatpush1.msra.mxu0 0.0
    %515 = vmatprep.subr.mxu0 0.0
    %516 = vmatpush1.msra.mxu0 0.0
    %517 = vmatprep.subr.mxu0 0.0
    %518 = vmatpush1.msra.mxu0 0.0
    %519 = vmatprep.subr.mxu0 0.0
    %520 = vmatpush1.msra.mxu0 0.0
    %521 = vmatprep.subr.mxu0 0.0
    %522 = vmatpush1.msra.mxu0 0.0
    %523 = vmatprep.subr.mxu0 0.0
    %524 = vmatpush1.msra.mxu0 0.0
    %525 = vmatprep.subr.mxu0 0.0
    %526 = vmatpush1.msra.mxu0 0.0
    %527 = vmatprep.mubr.f32.mxu0 0.0
    %528 = vmatmul.mubr.f32.gmra.mrb[0].mxu0 %v461
    %v529 = vpop.f32.mrb[0].mxu0
    %v530 = vadd.f32 0.0, %v529
    %v531 = vpop.f32.mrb[0].mxu0
    %532 = vdwg.mxu0
    %v534 = vrot.slane %v530, 2
    %v536 = vadd.f32 %v142, %v534
    %v537 = vxor.u32 %v536, 2147483648
    %v538 = vmul.f32 %v537, 1.442695
    %v539 = vpow.pop %v538
    %v540 = vadd.f32 %v539, 1.0
    %v541 = vrcp.pop %v540
    %v542 = vmul.f32 1.0, %v541
    %v543 = vtanh.pop %v536
    %545 = vrot.lane.b32.xlu0 %v542, 96
    %v546 = vpop.permute.xlu0 %545
    %v548 = vmul.f32 %v543, %v546
    %v549 = vrot.slane %v542, 2
    %550 = vrot.lane.b32.xlu0 %v549, 64
    %v551 = vpop.permute.xlu0 %550
    %v553 = vmul.f32 %v453, %v551
    %v555 = vrot.slane %v553, 6
    %v557 = vadd.f32 %v548, %v555
    %v558 = vtanh.pop %v557
    %559 = vrot.lane.b32.xlu0 %v542, 32
    %v560 = vpop.permute.xlu0 %559
    %v562 = vmul.f32 %v558, %v560
    %v564 = vrot.slane %v562, 6
    %v565 = vsel %vm154, %v564, 0
    %567 = vmatprep.subr.mxu0 0.0
    %568 = vmatpush1.msra.mxu0 %v150
    %569 = vmatprep.subr.mxu0 0.0
    %570 = vmatpush1.msra.mxu0 %v151
    %571 = vmatprep.subr.mxu0 0.0
    %572 = vmatpush1.msra.mxu0 %v152
    %573 = vmatprep.subr.mxu0 0.0
    %574 = vmatpush1.msra.mxu0 %v153
    %575 = vmatprep.subr.mxu0 0.0
    %576 = vmatpush1.msra.mxu0 0.0
    %577 = vmatprep.subr.mxu0 0.0
    %578 = vmatpush1.msra.mxu0 0.0
    %579 = vmatprep.subr.mxu0 0.0
    %580 = vmatpush1.msra.mxu0 0.0
    %581 = vmatprep.subr.mxu0 0.0
    %582 = vmatpush1.msra.mxu0 0.0
    %583 = vmatprep.subr.mxu0 0.0
    %584 = vmatpush1.msra.mxu0 0.0
    %585 = vmatprep.subr.mxu0 0.0
    %586 = vmatpush1.msra.mxu0 0.0
    %587 = vmatprep.subr.mxu0 0.0
    %588 = vmatpush1.msra.mxu0 0.0
    %589 = vmatprep.subr.mxu0 0.0
    %590 = vmatpush1.msra.mxu0 0.0
    %591 = vmatprep.subr.mxu0 0.0
    %592 = vmatpush1.msra.mxu0 0.0
    %593 = vmatprep.subr.mxu0 0.0
    %594 = vmatpush1.msra.mxu0 0.0
    %595 = vmatprep.subr.mxu0 0.0
    %596 = vmatpush1.msra.mxu0 0.0
    %597 = vmatprep.subr.mxu0 0.0
    %598 = vmatpush1.msra.mxu0 0.0
    %599 = vmatprep.subr.mxu0 0.0
    %600 = vmatpush1.msra.mxu0 0.0
    %601 = vmatprep.subr.mxu0 0.0
    %602 = vmatpush1.msra.mxu0 0.0
    %603 = vmatprep.subr.mxu0 0.0
    %604 = vmatpush1.msra.mxu0 0.0
    %605 = vmatprep.subr.mxu0 0.0
    %606 = vmatpush1.msra.mxu0 0.0
    %607 = vmatprep.subr.mxu0 0.0
    %608 = vmatpush1.msra.mxu0 0.0
    %609 = vmatprep.subr.mxu0 0.0
    %610 = vmatpush1.msra.mxu0 0.0
    %611 = vmatprep.subr.mxu0 0.0
    %612 = vmatpush1.msra.mxu0 0.0
    %613 = vmatprep.subr.mxu0 0.0
    %614 = vmatpush1.msra.mxu0 0.0
    %615 = vmatprep.subr.mxu0 0.0
    %616 = vmatpush1.msra.mxu0 0.0
    %617 = vmatprep.subr.mxu0 0.0
    %618 = vmatpush1.msra.mxu0 0.0
    %619 = vmatprep.subr.mxu0 0.0
    %620 = vmatpush1.msra.mxu0 0.0
    %621 = vmatprep.subr.mxu0 0.0
    %622 = vmatpush1.msra.mxu0 0.0
    %623 = vmatprep.subr.mxu0 0.0
    %624 = vmatpush1.msra.mxu0 0.0
    %625 = vmatprep.subr.mxu0 0.0
    %626 = vmatpush1.msra.mxu0 0.0
    %627 = vmatprep.subr.mxu0 0.0
    %628 = vmatpush1.msra.mxu0 0.0
    %629 = vmatprep.subr.mxu0 0.0
    %630 = vmatpush1.msra.mxu0 0.0
    %631 = vmatprep.mubr.f32.mxu0 0.0
    %632 = vmatmul.mubr.f32.gmra.mrb[0].mxu0 %v565
    %v633 = vpop.f32.mrb[0].mxu0
    %v634 = vadd.f32 0.0, %v633
    %v635 = vpop.f32.mrb[0].mxu0
    %636 = vdwg.mxu0
    %v637 = vadd.f32 %v147, %v634
    %v638 = vxor.u32 %v637, 2147483648
    %v639 = vmul.f32 %v638, 1.442695
    %v640 = vpow.pop %v639
    %v641 = vadd.f32 %v640, 1.0
    %v642 = vrcp.pop %v641
    %v643 = vmul.f32 1.0, %v642
    %v644 = vtanh.pop %v637
    %646 = vrot.lane.b32.xlu0 %v643, 96
    %v647 = vpop.permute.xlu0 %646
    %v649 = vmul.f32 %v644, %v647
    %v650 = vrot.slane %v643, 2
    %651 = vrot.lane.b32.xlu0 %v650, 64
    %v652 = vpop.permute.xlu0 %651
    %v654 = vmul.f32 %v557, %v652
    %v656 = vrot.slane %v654, 6
    %v658 = vadd.f32 %v649, %v656
    %v659 = vtanh.pop %v658
    %660 = vrot.lane.b32.xlu0 %v643, 32
    %v661 = vpop.permute.xlu0 %660
    %v663 = vmul.f32 %v659, %v661
    %v665 = vsel %vm154, %v663, 0
    %667 = vmatprep.subr.mxu0 0.0
    %668 = vmatpush1.msra.mxu0 %v150
    %669 = vmatprep.subr.mxu0 0.0
    %670 = vmatpush1.msra.mxu0 %v151
    %671 = vmatprep.subr.mxu0 0.0
    %672 = vmatpush1.msra.mxu0 %v152
    %673 = vmatprep.subr.mxu0 0.0
    %674 = vmatpush1.msra.mxu0 %v153
    %675 = vmatprep.subr.mxu0 0.0
    %676 = vmatpush1.msra.mxu0 0.0
    %677 = vmatprep.subr.mxu0 0.0
    %678 = vmatpush1.msra.mxu0 0.0
    %679 = vmatprep.subr.mxu0 0.0
    %680 = vmatpush1.msra.mxu0 0.0
    %681 = vmatprep.subr.mxu0 0.0
    %682 = vmatpush1.msra.mxu0 0.0
    %683 = vmatprep.subr.mxu0 0.0
    %684 = vmatpush1.msra.mxu0 0.0
    %685 = vmatprep.subr.mxu0 0.0
    %686 = vmatpush1.msra.mxu0 0.0
    %687 = vmatprep.subr.mxu0 0.0
    %688 = vmatpush1.msra.mxu0 0.0
    %689 = vmatprep.subr.mxu0 0.0
    %690 = vmatpush1.msra.mxu0 0.0
    %691 = vmatprep.subr.mxu0 0.0
    %692 = vmatpush1.msra.mxu0 0.0
    %693 = vmatprep.subr.mxu0 0.0
    %694 = vmatpush1.msra.mxu0 0.0
    %695 = vmatprep.subr.mxu0 0.0
    %696 = vmatpush1.msra.mxu0 0.0
    %697 = vmatprep.subr.mxu0 0.0
    %698 = vmatpush1.msra.mxu0 0.0
    %699 = vmatprep.subr.mxu0 0.0
    %700 = vmatpush1.msra.mxu0 0.0
    %701 = vmatprep.subr.mxu0 0.0
    %702 = vmatpush1.msra.mxu0 0.0
    %703 = vmatprep.subr.mxu0 0.0
    %704 = vmatpush1.msra.mxu0 0.0
    %705 = vmatprep.subr.mxu0 0.0
    %706 = vmatpush1.msra.mxu0 0.0
    %707 = vmatprep.subr.mxu0 0.0
    %708 = vmatpush1.msra.mxu0 0.0
    %709 = vmatprep.subr.mxu0 0.0
    %710 = vmatpush1.msra.mxu0 0.0
    %711 = vmatprep.subr.mxu0 0.0
    %712 = vmatpush1.msra.mxu0 0.0
    %713 = vmatprep.subr.mxu0 0.0
    %714 = vmatpush1.msra.mxu0 0.0
    %715 = vmatprep.subr.mxu0 0.0
    %716 = vmatpush1.msra.mxu0 0.0
    %717 = vmatprep.subr.mxu0 0.0
    %718 = vmatpush1.msra.mxu0 0.0
    %719 = vmatprep.subr.mxu0 0.0
    %720 = vmatpush1.msra.mxu0 0.0
    %721 = vmatprep.subr.mxu0 0.0
    %722 = vmatpush1.msra.mxu0 0.0
    %723 = vmatprep.subr.mxu0 0.0
    %724 = vmatpush1.msra.mxu0 0.0
    %725 = vmatprep.subr.mxu0 0.0
    %726 = vmatpush1.msra.mxu0 0.0
    %727 = vmatprep.subr.mxu0 0.0
    %728 = vmatpush1.msra.mxu0 0.0
    %729 = vmatprep.subr.mxu0 0.0
    %730 = vmatpush1.msra.mxu0 0.0
    %731 = vmatprep.mubr.f32.mxu0 0.0
    %732 = vmatmul.mubr.f32.gmra.mrb[0].mxu0 %v665
    %v733 = vpop.f32.mrb[0].mxu0
    %v734 = vadd.f32 0.0, %v733
    %v735 = vpop.f32.mrb[0].mxu0
    %736 = vdwg.mxu0
    %v738 = vrot.slane %v734, 6
    %v740 = vadd.f32 %v147, %v738
    %v741 = vxor.u32 %v740, 2147483648
    %v742 = vmul.f32 %v741, 1.442695
    %v743 = vpow.pop %v742
    %v744 = vadd.f32 %v743, 1.0
    %v745 = vrcp.pop %v744
    %v746 = vmul.f32 1.0, %v745
    %v747 = vtanh.pop %v740
    %749 = vrot.lane.b32.xlu0 %v746, 96
    %v750 = vpop.permute.xlu0 %749
    %v752 = vmul.f32 %v747, %v750
    %v753 = vrot.slane %v746, 2
    %754 = vrot.lane.b32.xlu0 %v753, 64
    %v755 = vpop.permute.xlu0 %754
    %v757 = vmul.f32 %v658, %v755
    %v759 = vrot.slane %v757, 6
    %v761 = vadd.f32 %v752, %v759
    %v762 = vtanh.pop %v761
    %763 = vrot.lane.b32.xlu0 %v746, 32
    %v764 = vpop.permute.xlu0 %763
    %v766 = vmul.f32 %v762, %v764
    %v768 = vrot.slane %v766, 2
    %v769 = vsel %vm154, %v768, 0
    %771 = vmatprep.subr.mxu0 0.0
    %772 = vmatpush1.msra.mxu0 %v150
    %773 = vmatprep.subr.mxu0 0.0
    %774 = vmatpush1.msra.mxu0 %v151
    %775 = vmatprep.subr.mxu0 0.0
    %776 = vmatpush1.msra.mxu0 %v152
    %777 = vmatprep.subr.mxu0 0.0
    %778 = vmatpush1.msra.mxu0 %v153
    %779 = vmatprep.subr.mxu0 0.0
    %780 = vmatpush1.msra.mxu0 0.0
    %781 = vmatprep.subr.mxu0 0.0
    %782 = vmatpush1.msra.mxu0 0.0
    %783 = vmatprep.subr.mxu0 0.0
    %784 = vmatpush1.msra.mxu0 0.0
    %785 = vmatprep.subr.mxu0 0.0
    %786 = vmatpush1.msra.mxu0 0.0
    %787 = vmatprep.subr.mxu0 0.0
    %788 = vmatpush1.msra.mxu0 0.0
    %789 = vmatprep.subr.mxu0 0.0
    %790 = vmatpush1.msra.mxu0 0.0
    %791 = vmatprep.subr.mxu0 0.0
    %792 = vmatpush1.msra.mxu0 0.0
    %793 = vmatprep.subr.mxu0 0.0
    %794 = vmatpush1.msra.mxu0 0.0
    %795 = vmatprep.subr.mxu0 0.0
    %796 = vmatpush1.msra.mxu0 0.0
    %797 = vmatprep.subr.mxu0 0.0
    %798 = vmatpush1.msra.mxu0 0.0
    %799 = vmatprep.subr.mxu0 0.0
    %800 = vmatpush1.msra.mxu0 0.0
    %801 = vmatprep.subr.mxu0 0.0
    %802 = vmatpush1.msra.mxu0 0.0
    %803 = vmatprep.subr.mxu0 0.0
    %804 = vmatpush1.msra.mxu0 0.0
    %805 = vmatprep.subr.mxu0 0.0
    %806 = vmatpush1.msra.mxu0 0.0
    %807 = vmatprep.subr.mxu0 0.0
    %808 = vmatpush1.msra.mxu0 0.0
    %809 = vmatprep.subr.mxu0 0.0
    %810 = vmatpush1.msra.mxu0 0.0
    %811 = vmatprep.subr.mxu0 0.0
    %812 = vmatpush1.msra.mxu0 0.0
    %813 = vmatprep.subr.mxu0 0.0
    %814 = vmatpush1.msra.mxu0 0.0
    %815 = vmatprep.subr.mxu0 0.0
    %816 = vmatpush1.msra.mxu0 0.0
    %817 = vmatprep.subr.mxu0 0.0
    %818 = vmatpush1.msra.mxu0 0.0
    %819 = vmatprep.subr.mxu0 0.0
    %820 = vmatpush1.msra.mxu0 0.0
    %821 = vmatprep.subr.mxu0 0.0
    %822 = vmatpush1.msra.mxu0 0.0
    %823 = vmatprep.subr.mxu0 0.0
    %824 = vmatpush1.msra.mxu0 0.0
    %825 = vmatprep.subr.mxu0 0.0
    %826 = vmatpush1.msra.mxu0 0.0
    %827 = vmatprep.subr.mxu0 0.0
    %828 = vmatpush1.msra.mxu0 0.0
    %829 = vmatprep.subr.mxu0 0.0
    %830 = vmatpush1.msra.mxu0 0.0
    %831 = vmatprep.subr.mxu0 0.0
    %832 = vmatpush1.msra.mxu0 0.0
    %833 = vmatprep.subr.mxu0 0.0
    %834 = vmatpush1.msra.mxu0 0.0
    %835 = vmatprep.mubr.f32.mxu0 0.0
    %836 = vmatmul.mubr.f32.gmra.mrb[0].mxu0 %v769
    %v837 = vpop.f32.mrb[0].mxu0
    %v838 = vadd.f32 0.0, %v837
    %v839 = vpop.f32.mrb[0].mxu0
    %840 = vdwg.mxu0
    %v842 = vrot.slane %v838, 4
    %v844 = vadd.f32 %v147, %v842
    %v845 = vxor.u32 %v844, 2147483648
    %v846 = vmul.f32 %v845, 1.442695
    %v847 = vpow.pop %v846
    %v848 = vadd.f32 %v847, 1.0
    %v849 = vrcp.pop %v848
    %v850 = vmul.f32 1.0, %v849
    %v851 = vtanh.pop %v844
    %853 = vrot.lane.b32.xlu0 %v850, 96
    %v854 = vpop.permute.xlu0 %853
    %v856 = vmul.f32 %v851, %v854
    %v857 = vrot.slane %v850, 2
    %858 = vrot.lane.b32.xlu0 %v857, 64
    %v859 = vpop.permute.xlu0 %858
    %v861 = vmul.f32 %v761, %v859
    %v863 = vrot.slane %v861, 6
    %v865 = vadd.f32 %v856, %v863
    %v866 = vtanh.pop %v865
    %867 = vrot.lane.b32.xlu0 %v850, 32
    %v868 = vpop.permute.xlu0 %867
    %v870 = vmul.f32 %v866, %v868
    %v872 = vrot.slane %v870, 4
    %v873 = vsel %vm154, %v872, 0
    %875 = vmatprep.subr.mxu0 0.0
    %876 = vmatpush1.msra.mxu0 %v150
    %877 = vmatprep.subr.mxu0 0.0
    %878 = vmatpush1.msra.mxu0 %v151
    %879 = vmatprep.subr.mxu0 0.0
    %880 = vmatpush1.msra.mxu0 %v152
    %881 = vmatprep.subr.mxu0 0.0
    %882 = vmatpush1.msra.mxu0 %v153
    %883 = vmatprep.subr.mxu0 0.0
    %884 = vmatpush1.msra.mxu0 0.0
    %885 = vmatprep.subr.mxu0 0.0
    %886 = vmatpush1.msra.mxu0 0.0
    %887 = vmatprep.subr.mxu0 0.0
    %888 = vmatpush1.msra.mxu0 0.0
    %889 = vmatprep.subr.mxu0 0.0
    %890 = vmatpush1.msra.mxu0 0.0
    %891 = vmatprep.subr.mxu0 0.0
    %892 = vmatpush1.msra.mxu0 0.0
    %893 = vmatprep.subr.mxu0 0.0
    %894 = vmatpush1.msra.mxu0 0.0
    %895 = vmatprep.subr.mxu0 0.0
    %896 = vmatpush1.msra.mxu0 0.0
    %897 = vmatprep.subr.mxu0 0.0
    %898 = vmatpush1.msra.mxu0 0.0
    %899 = vmatprep.subr.mxu0 0.0
    %900 = vmatpush1.msra.mxu0 0.0
    %901 = vmatprep.subr.mxu0 0.0
    %902 = vmatpush1.msra.mxu0 0.0
    %903 = vmatprep.subr.mxu0 0.0
    %904 = vmatpush1.msra.mxu0 0.0
    %905 = vmatprep.subr.mxu0 0.0
    %906 = vmatpush1.msra.mxu0 0.0
    %907 = vmatprep.subr.mxu0 0.0
    %908 = vmatpush1.msra.mxu0 0.0
    %909 = vmatprep.subr.mxu0 0.0
    %910 = vmatpush1.msra.mxu0 0.0
    %911 = vmatprep.subr.mxu0 0.0
    %912 = vmatpush1.msra.mxu0 0.0
    %913 = vmatprep.subr.mxu0 0.0
    %914 = vmatpush1.msra.mxu0 0.0
    %915 = vmatprep.subr.mxu0 0.0
    %916 = vmatpush1.msra.mxu0 0.0
    %917 = vmatprep.subr.mxu0 0.0
    %918 = vmatpush1.msra.mxu0 0.0
    %919 = vmatprep.subr.mxu0 0.0
    %920 = vmatpush1.msra.mxu0 0.0
    %921 = vmatprep.subr.mxu0 0.0
    %922 = vmatpush1.msra.mxu0 0.0
    %923 = vmatprep.subr.mxu0 0.0
    %924 = vmatpush1.msra.mxu0 0.0
    %925 = vmatprep.subr.mxu0 0.0
    %926 = vmatpush1.msra.mxu0 0.0
    %927 = vmatprep.subr.mxu0 0.0
    %928 = vmatpush1.msra.mxu0 0.0
    %929 = vmatprep.subr.mxu0 0.0
    %930 = vmatpush1.msra.mxu0 0.0
    %931 = vmatprep.subr.mxu0 0.0
    %932 = vmatpush1.msra.mxu0 0.0
    %933 = vmatprep.subr.mxu0 0.0
    %934 = vmatpush1.msra.mxu0 0.0
    %935 = vmatprep.subr.mxu0 0.0
    %936 = vmatpush1.msra.mxu0 0.0
    %937 = vmatprep.subr.mxu0 0.0
    %938 = vmatpush1.msra.mxu0 0.0
    %939 = vmatprep.mubr.f32.mxu0 0.0
    %940 = vmatmul.mubr.f32.gmra.mrb[0].mxu0 %v873
    %v941 = vpop.f32.mrb[0].mxu0
    %v942 = vadd.f32 0.0, %v941
    %v943 = vpop.f32.mrb[0].mxu0
    %944 = vdwg.mxu0
    %v946 = vrot.slane %v942, 2
    %v948 = vadd.f32 %v147, %v946
    %v949 = vxor.u32 %v948, 2147483648
    %v950 = vmul.f32 %v949, 1.442695
    %v951 = vpow.pop %v950
    %v952 = vadd.f32 %v951, 1.0
    %v953 = vrcp.pop %v952
    %v954 = vmul.f32 1.0, %v953
    %v955 = vtanh.pop %v948
    %957 = vrot.lane.b32.xlu0 %v954, 96
    %v958 = vpop.permute.xlu0 %957
    %v960 = vmul.f32 %v955, %v958
    %v961 = vrot.slane %v954, 2
    %962 = vrot.lane.b32.xlu0 %v961, 64
    %v963 = vpop.permute.xlu0 %962
    %v965 = vmul.f32 %v865, %v963
    %v967 = vrot.slane %v965, 6
    %v969 = vadd.f32 %v960, %v967
    %v970 = vtanh.pop %v969
    %971 = vrot.lane.b32.xlu0 %v954, 32
    %v972 = vpop.permute.xlu0 %971
    %v974 = vmul.f32 %v970, %v972
    %v975 = vld [vmem:[#allocation5] sm:$0xff]
    %v976 = vld [vmem:[#allocation5 + $0x8] sm:$0xff]
    %v977 = vld [vmem:[#allocation5 + $0x10] sm:$0xff]
    %v978 = vld [vmem:[#allocation5 + $0x18] sm:$0xff]
    %v980 = vrot.slane %v974, 6
    %v981 = vsel %vm154, %v980, 0
    %983 = vmatprep.subr.mxu0 0.0
    %984 = vmatpush1.msra.mxu0 %v975
    %985 = vmatprep.subr.mxu0 0.0
    %986 = vmatpush1.msra.mxu0 %v976
    %987 = vmatprep.subr.mxu0 0.0
    %988 = vmatpush1.msra.mxu0 %v977
    %989 = vmatprep.subr.mxu0 0.0
    %990 = vmatpush1.msra.mxu0 %v978
    %991 = vmatprep.subr.mxu0 0.0
    %992 = vmatpush1.msra.mxu0 0.0
    %993 = vmatprep.subr.mxu0 0.0
    %994 = vmatpush1.msra.mxu0 0.0
    %995 = vmatprep.subr.mxu0 0.0
    %996 = vmatpush1.msra.mxu0 0.0
    %997 = vmatprep.subr.mxu0 0.0
    %998 = vmatpush1.msra.mxu0 0.0
    %999 = vmatprep.subr.mxu0 0.0
    %1000 = vmatpush1.msra.mxu0 0.0
    %1001 = vmatprep.subr.mxu0 0.0
    %1002 = vmatpush1.msra.mxu0 0.0
    %1003 = vmatprep.subr.mxu0 0.0
    %1004 = vmatpush1.msra.mxu0 0.0
    %1005 = vmatprep.subr.mxu0 0.0
    %1006 = vmatpush1.msra.mxu0 0.0
    %1007 = vmatprep.subr.mxu0 0.0
    %1008 = vmatpush1.msra.mxu0 0.0
    %1009 = vmatprep.subr.mxu0 0.0
    %1010 = vmatpush1.msra.mxu0 0.0
    %1011 = vmatprep.subr.mxu0 0.0
    %1012 = vmatpush1.msra.mxu0 0.0
    %1013 = vmatprep.subr.mxu0 0.0
    %1014 = vmatpush1.msra.mxu0 0.0
    %1015 = vmatprep.subr.mxu0 0.0
    %1016 = vmatpush1.msra.mxu0 0.0
    %1017 = vmatprep.subr.mxu0 0.0
    %1018 = vmatpush1.msra.mxu0 0.0
    %1019 = vmatprep.subr.mxu0 0.0
    %1020 = vmatpush1.msra.mxu0 0.0
    %1021 = vmatprep.subr.mxu0 0.0
    %1022 = vmatpush1.msra.mxu0 0.0
    %1023 = vmatprep.subr.mxu0 0.0
    %1024 = vmatpush1.msra.mxu0 0.0
    %1025 = vmatprep.subr.mxu0 0.0
    %1026 = vmatpush1.msra.mxu0 0.0
    %1027 = vmatprep.subr.mxu0 0.0
    %1028 = vmatpush1.msra.mxu0 0.0
    %1029 = vmatprep.subr.mxu0 0.0
    %1030 = vmatpush1.msra.mxu0 0.0
    %1031 = vmatprep.subr.mxu0 0.0
    %1032 = vmatpush1.msra.mxu0 0.0
    %1033 = vmatprep.subr.mxu0 0.0
    %1034 = vmatpush1.msra.mxu0 0.0
    %1035 = vmatprep.subr.mxu0 0.0
    %1036 = vmatpush1.msra.mxu0 0.0
    %1037 = vmatprep.subr.mxu0 0.0
    %1038 = vmatpush1.msra.mxu0 0.0
    %1039 = vmatprep.subr.mxu0 0.0
    %1040 = vmatpush1.msra.mxu0 0.0
    %1041 = vmatprep.subr.mxu0 0.0
    %1042 = vmatpush1.msra.mxu0 0.0
    %1043 = vmatprep.subr.mxu0 0.0
    %1044 = vmatpush1.msra.mxu0 0.0
    %1045 = vmatprep.subr.mxu0 0.0
    %1046 = vmatpush1.msra.mxu0 0.0
    %1047 = vmatprep.mubr.f32.mxu0 0.0
    %1048 = vmatmul.mubr.f32.gmra.mrb[0].mxu0 %v981
    %v1049 = vpop.f32.mrb[0].mxu0
    %v1050 = vadd.f32 0.0, %v1049
    %v1051 = vpop.f32.mrb[0].mxu0
    %1052 = vdwg.mxu0
    %1053 = vst [vmem:[#allocation7] sm:$0x3] %v1050
    // Predicated region
    $region26: #{tpu_custom_call.1} parent=1 // pred_check
      _
    $region27: #{tpu_custom_call.1} parent=1 // pred_check_branch
      %1055 = sbr.rel (0) target = $region29
    $region28: #{tpu_custom_call.1} parent=1 // pred_region
      %s1057 = ssub.s32 32, 32
      %1058 = vsyncadd [#allocation4], %s1057
      %s1060 = sshll.u32 [#allocation7], 4
      %s1061 = int_to_ptr.vmem [resolvable:$true] %s1060
      %1063 = dma.vmem_to_hbm [thread:$0]  %s1061, 32, %s4, [#allocation4]
    $region29: #{tpu_custom_call.1} parent=1 // pred_fallthru
      _
    // Predicated region
    $region30: #{tpu_custom_call.1} parent=1 // pred_check
      _
    $region31: #{tpu_custom_call.1} parent=1 // pred_check_branch
      %1065 = sbr.rel (0) target = $region33
    $region32: #{tpu_custom_call.1} parent=1 // pred_region
      %1066 = dma.done [#allocation4], 32
    $region33: #{tpu_custom_call.1} parent=1 // pred_fallthru
      _
    %1067 = vsyncpa [#allocation3], 1
    %1068 = vsyncpa [#allocation6], 1
    %1069 = vsyncpa [#allocation4], 1

</llo_original>
